<compile_context>
chip_gen: v6e
topology: v6e:2x2x1
jax: 0.10.0
libtpu: 0.0.40
codegen_flags: <defaults>
</compile_context>

<pallas_src>
import functools

import jax
import jax.numpy as jnp
from jax.experimental import pallas as pl
from jax.experimental.pallas import tpu as pltpu


def _round_up(x: int, m: int) -> int:
    return (x + m - 1) // m * m


def _sublane_pack(dtype) -> int:
    size = jnp.dtype(dtype).itemsize
    if size >= 4:
        return 8
    if size == 2:
        return 16
    return 32


def _vmem_limit_bytes() -> int:
    """Generation-aware scoped VMEM limit (leaves headroom vs. physical)."""
    try:
        cap = int(pltpu.get_tpu_info().vmem_capacity_bytes)
    except Exception:
        cap = 64 << 20  # conservative fallback (v7x per-core VMEM)
    return max(32 << 20, min(3 * cap // 4, 96 << 20))


def _focal_pow(one_minus_p, gamma: float):
    g = float(gamma)
    if g.is_integer() and 0.0 <= g <= 8.0:
        out = jnp.ones_like(one_minus_p)
        for _ in range(int(g)):
            out = out * one_minus_p
        return out
    return jnp.power(one_minus_p, g)


def _focal_kernel_class_minor(logits_ref, targets_ref, alpha_ref, out_ref, *,
                              gamma: float, n_rem: int, has_partial: bool):
    """C < 128 path: logits (C, TILE_N) — classes on sublanes, batch on lanes."""
    x = logits_ref[...].astype(jnp.float32)          # (C, TN)
    t = targets_ref[...]                             # (1, TN) int32
    a = alpha_ref[...].astype(jnp.float32)           # (C, 1)

    cls = jax.lax.broadcasted_iota(jnp.int32, x.shape, 0)
    hit = cls == t                                    # (C, TN) bool

    m = jnp.max(x, axis=0, keepdims=True)                             # (1, TN)
    lse = jnp.log(jnp.sum(jnp.exp(x - m), axis=0, keepdims=True))     # (1, TN)
    x_t = jnp.sum(jnp.where(hit, x, 0.0), axis=0, keepdims=True)      # (1, TN)
    a_t = jnp.sum(jnp.where(hit, a, 0.0), axis=0, keepdims=True)      # (1, TN)

    log_p = x_t - m - lse
    p_t = jnp.exp(log_p)
    loss = -a_t * _focal_pow(1.0 - p_t, gamma) * log_p                # (1, TN)

    def _write(vals):
        out_ref[...] = jnp.broadcast_to(jnp.sum(vals), out_ref.shape)

    if has_partial:
        last = pl.num_programs(0) - 1
        i = pl.program_id(0)

        @pl.when(i != last)
        def _():
            _write(loss)

        @pl.when(i == last)
        def _():
            col = jax.lax.broadcasted_iota(jnp.int32, loss.shape, 1)
            _write(jnp.where(col < n_rem, loss, 0.0))
    else:
        _write(loss)


def _focal_kernel_class_major(logits_ref, targets_ref, alpha_ref, out_ref, *,
                              gamma: float, n_rem: int, has_partial: bool):
    """C >= 128 path: logits (TILE_N, C) — batch on sublanes, classes on lanes."""
    x = logits_ref[...].astype(jnp.float32)          # (TR, C)
    t = targets_ref[...]                             # (TR, 1) int32
    a = alpha_ref[...].astype(jnp.float32)           # (1, C)

    cls = jax.lax.broadcasted_iota(jnp.int32, x.shape, 1)
    hit = cls == t                                    # (TR, C) bool

    m = jnp.max(x, axis=1, keepdims=True)                             # (TR, 1)
    lse = jnp.log(jnp.sum(jnp.exp(x - m), axis=1, keepdims=True))     # (TR, 1)
    x_t = jnp.sum(jnp.where(hit, x, 0.0), axis=1, keepdims=True)      # (TR, 1)
    a_t = jnp.sum(jnp.where(hit, a, 0.0), axis=1, keepdims=True)      # (TR, 1)

    log_p = x_t - m - lse
    p_t = jnp.exp(log_p)
    loss = -a_t * _focal_pow(1.0 - p_t, gamma) * log_p                # (TR, 1)

    def _write(vals):
        out_ref[...] = jnp.broadcast_to(jnp.sum(vals), out_ref.shape)

    if has_partial:
        last = pl.num_programs(0) - 1
        i = pl.program_id(0)

        @pl.when(i != last)
        def _():
            _write(loss)

        @pl.when(i == last)
        def _():
            row = jax.lax.broadcasted_iota(jnp.int32, loss.shape, 0)
            _write(jnp.where(row < n_rem, loss, 0.0))
    else:
        _write(loss)


def focal_loss(logits, targets, alpha, *, gamma: float = 2.0,
               size_average: bool = True, tile: int | None = None):
    """Pallas TPU focal loss.

    logits:  (N, C) float (f32 or bf16; cast to f32 per tile in-kernel)
    targets: (N,)   int class indices in [0, C)
    alpha:   (C,) or (C, 1) per-class weights
    returns: scalar float32 loss (mean if size_average else sum)
    """
    N, C = logits.shape
    in_dtype = logits.dtype
    itemsize = jnp.dtype(in_dtype).itemsize
    sub = _sublane_pack(in_dtype)

    vmem_limit = _vmem_limit_bytes()
    budget = int(vmem_limit * 0.7)          # headroom for pipeline bookkeeping

    class_minor = C < 128

    if class_minor:
        # Transposed (C, N) layout: batch along the 128-wide lane axis.
        c_in = _round_up(C, sub)            # sublane-padded input rows in VMEM
        c_f32 = _round_up(C, 8)             # f32 working-copy padding
        per_col = (2 * c_in * itemsize      # double-buffered logits tile
                   + 2 * 8 * 4              # double-buffered (1, TN) int32 targets
                   + 3 * c_f32 * 4)         # block-sized f32 temporaries
        if tile is None:
            tile = budget // per_col
        tile = max(128, (int(tile) // 128) * 128)
        tile = min(tile, _round_up(N, 128))

        grid = pl.cdiv(N, tile)
        has_partial = (N % tile) != 0
        n_rem = N - (grid - 1) * tile

        logits_in = jnp.transpose(logits)                     # (C, N) lane-dense repack
        targets_in = targets.reshape(1, N).astype(jnp.int32)  # (1, N)
        alpha_in = alpha.reshape(C, 1).astype(jnp.float32)    # (C, 1)

        kernel = functools.partial(_focal_kernel_class_minor, gamma=float(gamma),
                                   n_rem=int(n_rem), has_partial=bool(has_partial))
        in_specs = [
            pl.BlockSpec((C, tile), lambda i: (0, i)),
            pl.BlockSpec((1, tile), lambda i: (0, i)),
            pl.BlockSpec((C, 1), lambda i: (0, 0)),
        ]
    else:
        # Row-major (N, C) layout: classes already lane-dense.
        c_lanes = _round_up(C, 128)
        per_row = (2 * c_lanes * itemsize   # double-buffered logits tile
                   + 2 * 128 * 4            # double-buffered (TR, 1) int32 targets
                   + 3 * c_lanes * 4)       # block-sized f32 temporaries
        if tile is None:
            tile = budget // per_row
        tile = max(sub, (int(tile) // sub) * sub)
        tile = min(tile, _round_up(N, sub))

        grid = pl.cdiv(N, tile)
        has_partial = (N % tile) != 0
        n_rem = N - (grid - 1) * tile

        logits_in = logits
        targets_in = targets.reshape(N, 1).astype(jnp.int32)
        alpha_in = alpha.reshape(1, C).astype(jnp.float32)

        kernel = functools.partial(_focal_kernel_class_major, gamma=float(gamma),
                                   n_rem=int(n_rem), has_partial=bool(has_partial))
        in_specs = [
            pl.BlockSpec((tile, C), lambda i: (i, 0)),
            pl.BlockSpec((tile, 1), lambda i: (i, 0)),
            pl.BlockSpec((1, C), lambda i: (0, 0)),
        ]

    partials = pl.pallas_call(
        kernel,
        out_shape=jax.ShapeDtypeStruct((grid, 8, 128), jnp.float32),
        grid=(grid,),
        in_specs=in_specs,
        out_specs=pl.BlockSpec((1, 8, 128), lambda i: (i, 0, 0)),
        compiler_params=pltpu.CompilerParams(
            dimension_semantics=("parallel",),
            vmem_limit_bytes=int(vmem_limit)),
    )(logits_in, targets_in, alpha_in)

    total = jnp.sum(partials[:, 0, 0])
    if size_average:
        total = total / jnp.float32(N)
    return total


def _focal_loss_ref(logits, targets, alpha, gamma=2.0, size_average=True):
    """Pure-JAX reference mirroring the PyTorch forward."""
    logits = logits.astype(jnp.float32)
    p = jax.nn.softmax(logits, axis=1)
    onehot = jax.nn.one_hot(targets, logits.shape[1], dtype=jnp.float32)
    probs = jnp.sum(p * onehot, axis=1, keepdims=True)
    a = alpha.reshape(-1).astype(jnp.float32)[targets].reshape(-1, 1)
    batch_loss = -a * jnp.power(1.0 - probs, gamma) * jnp.log(probs)
    return jnp.mean(batch_loss) if size_average else jnp.sum(batch_loss)


if __name__ == "__main__":
    class_num = 5
    gamma = 2.0

    key = jax.random.PRNGKey(0)
    k1, k2, k3, k4, k5, k6 = jax.random.split(key, 6)

    # Default FocalLoss() __init__ (alpha=None, items_ratio=None): alpha = ones
    alpha = jnp.ones((class_num,), dtype=jnp.float32)

    # 1) module-default shapes (C=5 -> lane-dense class-minor path), single tile
    N = 8
    logits = jax.random.normal(k1, (N, class_num), dtype=jnp.float32)
    targets = jax.random.randint(k2, (N,), 0, class_num, dtype=jnp.int32)
    loss = jax.block_until_ready(focal_loss(logits, targets, alpha, gamma=gamma))
    ref = _focal_loss_ref(logits, targets, alpha, gamma=gamma)
    assert jnp.allclose(loss, ref, rtol=1e-5, atol=1e-5), (loss, ref)

    # 2) multi-tile grid + partial (masked) last tile on the class-minor path
    N2 = 300
    logits2 = jax.random.normal(k3, (N2, class_num), dtype=jnp.float32)
    targets2 = jax.random.randint(k4, (N2,), 0, class_num, dtype=jnp.int32)
    loss2 = jax.block_until_ready(
        focal_loss(logits2, targets2, alpha, gamma=gamma, tile=128))
    ref2 = _focal_loss_ref(logits2, targets2, alpha, gamma=gamma)
    assert jnp.allclose(loss2, ref2, rtol=1e-5, atol=1e-5), (loss2, ref2)

    # 3) class-major (C >= 128) path: multi-tile, partial last tile, sum reduction
    C3, N3 = 128, 40
    alpha3 = jax.random.uniform(k5, (C3,), jnp.float32, 0.5, 2.0)
    logits3 = jax.random.normal(k6, (N3, C3), dtype=jnp.float32)
    targets3 = jax.random.randint(k2, (N3,), 0, C3, dtype=jnp.int32)
    loss3 = jax.block_until_ready(
        focal_loss(logits3, targets3, alpha3, gamma=gamma,
                   size_average=False, tile=16))
    ref3 = _focal_loss_ref(logits3, targets3, alpha3, gamma=gamma,
                           size_average=False)
    assert jnp.allclose(loss3, ref3, rtol=1e-5, atol=1e-4), (loss3, ref3)

    print("KERNEL_OK")
</pallas_src>

<mosaic_0001>
module attributes {stable_mosaic.version = 11 : i64} {
  func.func @_focal_kernel_class_minor(%arg0: i32, %arg1: memref<5x128xf32, #tpu.memory_space<vmem>>, %arg2: memref<1x128xi32, #tpu.memory_space<vmem>>, %arg3: memref<5x1xf32, #tpu.memory_space<vmem>>, %arg4: memref<1x8x128xf32, #tpu.memory_space<vmem>>) attributes {dimension_semantics = [#tpu.dimension_semantics<parallel>], iteration_bounds = array<i64: 1>, scalar_prefetch = 0 : i64, scratch_operands = 0 : i64, tpu.core_type = #tpu.core_type<tc>, window_params = [{transform_indices = @transform_0, window_bounds = array<i64: 5, 128>}, {transform_indices = @transform_1, window_bounds = array<i64: 1, 128>}, {pipeline_mode = #tpu.pipeline_mode<synchronous>, transform_indices = @transform_2, window_bounds = array<i64: 5, 1>}, {transform_indices = @transform_3, window_bounds = array<i64: 1, 8, 128>}]} {
    %c0 = arith.constant 0 : index
    %c0_0 = arith.constant 0 : index
    %0 = vector.load %arg1[%c0, %c0_0] : memref<5x128xf32, #tpu.memory_space<vmem>>, vector<5x128xf32>
    %c0_1 = arith.constant 0 : index
    %c0_2 = arith.constant 0 : index
    %1 = vector.load %arg2[%c0_1, %c0_2] : memref<1x128xi32, #tpu.memory_space<vmem>>, vector<1x128xi32>
    %c0_3 = arith.constant 0 : index
    %c0_4 = arith.constant 0 : index
    %2 = vector.load %arg3[%c0_3, %c0_4] : memref<5x1xf32, #tpu.memory_space<vmem>>, vector<5x1xf32>
    %3 = tpu.iota {dimensions = array<i32: 0>} : vector<5x128xi32>
    %4 = vector.broadcast %1 : vector<1x128xi32> to vector<5x128xi32>
    %5 = arith.cmpi eq, %3, %4 : vector<5x128xi32>
    %cst = arith.constant dense<0xFF800000> : vector<128xf32>
    %6 = vector.multi_reduction <maximumf>, %0, %cst [0] : vector<5x128xf32> to vector<128xf32>
    %7 = vector.shape_cast %6 : vector<128xf32> to vector<1x128xf32>
    %8 = vector.broadcast %7 : vector<1x128xf32> to vector<5x128xf32>
    %9 = arith.subf %0, %8 : vector<5x128xf32>
    %10 = math.exp %9 : vector<5x128xf32>
    %cst_5 = arith.constant dense<0.000000e+00> : vector<128xf32>
    %11 = vector.multi_reduction <add>, %10, %cst_5 [0] : vector<5x128xf32> to vector<128xf32>
    %12 = vector.shape_cast %11 : vector<128xf32> to vector<1x128xf32>
    %13 = math.log %12 : vector<1x128xf32>
    %cst_6 = arith.constant 0.000000e+00 : f32
    %14 = vector.broadcast %cst_6 : f32 to vector<5x128xf32>
    %15 = arith.select %5, %0, %14 : vector<5x128xi1>, vector<5x128xf32>
    %cst_7 = arith.constant dense<0.000000e+00> : vector<128xf32>
    %16 = vector.multi_reduction <add>, %15, %cst_7 [0] : vector<5x128xf32> to vector<128xf32>
    %17 = vector.shape_cast %16 : vector<128xf32> to vector<1x128xf32>
    %cst_8 = arith.constant 0.000000e+00 : f32
    %18 = vector.shape_cast %2 : vector<5x1xf32> to vector<5x1xf32>
    %19 = vector.broadcast %18 : vector<5x1xf32> to vector<5x128xf32>
    %20 = vector.broadcast %cst_8 : f32 to vector<5x128xf32>
    %21 = arith.select %5, %19, %20 : vector<5x128xi1>, vector<5x128xf32>
    %cst_9 = arith.constant dense<0.000000e+00> : vector<128xf32>
    %22 = vector.multi_reduction <add>, %21, %cst_9 [0] : vector<5x128xf32> to vector<128xf32>
    %23 = vector.shape_cast %22 : vector<128xf32> to vector<1x128xf32>
    %24 = arith.subf %17, %7 : vector<1x128xf32>
    %25 = arith.subf %24, %13 : vector<1x128xf32>
    %26 = math.exp %25 : vector<1x128xf32>
    %cst_10 = arith.constant 0.000000e+00 : f32
    %27 = vector.broadcast %cst_10 : f32 to vector<1x128xf32>
    %28 = arith.subf %27, %23 : vector<1x128xf32>
    %cst_11 = arith.constant 1.000000e+00 : f32
    %29 = vector.broadcast %cst_11 : f32 to vector<1x128xf32>
    %30 = arith.subf %29, %26 : vector<1x128xf32>
    %cst_12 = arith.constant 1.000000e+00 : f32
    %31 = vector.broadcast %cst_12 : f32 to vector<1x128xf32>
    %32 = arith.mulf %31, %30 : vector<1x128xf32>
    %33 = arith.mulf %32, %30 : vector<1x128xf32>
    %34 = arith.mulf %28, %33 : vector<1x128xf32>
    %35 = arith.mulf %34, %25 : vector<1x128xf32>
    %c0_i32 = arith.constant 0 : i32
    %36 = arith.cmpi ne, %arg0, %c0_i32 : i32
    %37 = arith.extui %36 : i1 to i32
    %c0_i32_13 = arith.constant 0 : i32
    %38 = arith.cmpi ne, %37, %c0_i32_13 : i32
    scf.if %38 {
      %42 = vector.shape_cast %35 : vector<1x128xf32> to vector<1x1x128xf32>
      %cst_16 = arith.constant dense<0.000000e+00> : vector<1xf32>
      %43 = vector.multi_reduction <add>, %42, %cst_16 [1, 2] : vector<1x1x128xf32> to vector<1xf32>
      %44 = vector.shape_cast %43 : vector<1xf32> to vector<1x1x1xf32>
      %45 = vector.extract %44[0, 0, 0] : f32 from vector<1x1x1xf32>
      %46 = vector.broadcast %45 : f32 to vector<1x8x128xf32>
      %c0_17 = arith.constant 0 : index
      %c0_18 = arith.constant 0 : index
      %c0_19 = arith.constant 0 : index
      %47 = vector.load %arg4[%c0_17, %c0_18, %c0_19] : memref<1x8x128xf32, #tpu.memory_space<vmem>>, vector<1x8x128xf32>
      tpu.vector_store %arg4[%c0_17, %c0_18, %c0_19], %46 {strides = array<i32>} : memref<1x8x128xf32, #tpu.memory_space<vmem>>, vector<1x8x128xf32>,
    } else {
    }
    %c0_i32_14 = arith.constant 0 : i32
    %39 = arith.cmpi eq, %arg0, %c0_i32_14 : i32
    %40 = arith.extui %39 : i1 to i32
    %c0_i32_15 = arith.constant 0 : i32
    %41 = arith.cmpi ne, %40, %c0_i32_15 : i32
    scf.if %41 {
      %42 = tpu.iota {dimensions = array<i32: 1>} : vector<1x128xi32>
      %c8_i32 = arith.constant 8 : i32
      %43 = vector.broadcast %c8_i32 : i32 to vector<1x128xi32>
      %44 = arith.cmpi slt, %42, %43 : vector<1x128xi32>
      %cst_16 = arith.constant 0.000000e+00 : f32
      %45 = vector.broadcast %cst_16 : f32 to vector<1x128xf32>
      %46 = arith.select %44, %35, %45 : vector<1x128xi1>, vector<1x128xf32>
      %47 = vector.shape_cast %46 : vector<1x128xf32> to vector<1x1x128xf32>
      %cst_17 = arith.constant dense<0.000000e+00> : vector<1xf32>
      %48 = vector.multi_reduction <add>, %47, %cst_17 [1, 2] : vector<1x1x128xf32> to vector<1xf32>
      %49 = vector.shape_cast %48 : vector<1xf32> to vector<1x1x1xf32>
      %50 = vector.extract %49[0, 0, 0] : f32 from vector<1x1x1xf32>
      %51 = vector.broadcast %50 : f32 to vector<1x8x128xf32>
      %c0_18 = arith.constant 0 : index
      %c0_19 = arith.constant 0 : index
      %c0_20 = arith.constant 0 : index
      %52 = vector.load %arg4[%c0_18, %c0_19, %c0_20] : memref<1x8x128xf32, #tpu.memory_space<vmem>>, vector<1x8x128xf32>
      tpu.vector_store %arg4[%c0_18, %c0_19, %c0_20], %51 {strides = array<i32>} : memref<1x8x128xf32, #tpu.memory_space<vmem>>, vector<1x8x128xf32>,
    } else {
    }
    return
  }
  func.func @transform_0(%arg0: i32) -> (i32, i32) {
    %c0_i32 = arith.constant 0 : i32
    %c0_i32_0 = arith.constant 0 : i32
    return %c0_i32, %arg0 : i32, i32
  }
  func.func @transform_1(%arg0: i32) -> (i32, i32) {
    %c0_i32 = arith.constant 0 : i32
    %c0_i32_0 = arith.constant 0 : i32
    return %c0_i32, %arg0 : i32, i32
  }
  func.func @transform_2(%arg0: i32) -> (i32, i32) {
    %c0_i32 = arith.constant 0 : i32
    %c0_i32_0 = arith.constant 0 : i32
    %c0_i32_1 = arith.constant 0 : i32
    return %c0_i32, %c0_i32_0 : i32, i32
  }
  func.func @transform_3(%arg0: i32) -> (i32, i32, i32) {
    %c0_i32 = arith.constant 0 : i32
    %c0_i32_0 = arith.constant 0 : i32
    %c0_i32_1 = arith.constant 0 : i32
    return %arg0, %c0_i32, %c0_i32_0 : i32, i32, i32
  }
}

</mosaic_0001>

<llo_original>
// kernel: tpu_custom_call.1
$region0: #{tpu_custom_call.1}
  #allocation0 [shape = 'u32[]', space=smem, size = 0x4, offset = 0x4, fixed_abs, tag = 'smem constant byte address 0x4 - core index']
  #allocation1 [shape = 'u32[144,128]{1,0:T(1,128)}', space=vmem, size = 0x12000, scoped, tag = 'internal scratch']
  %s0 = inlined_call_operand.vmem [shape: f32[5,8], index: 0, kind: input, shape index: {}]
  %s1 = inlined_call_operand.vmem [shape: s32[1,8], index: 1, kind: input, shape index: {}]
  %s2 = inlined_call_operand.vmem [shape: f32[5,1], index: 2, kind: input, shape index: {}]
  %s3 = inlined_call_operand.hbm [shape: f32[1,8,128], index: 3, kind: output, shape index: {}]
  %s4 = sld [smem:[#allocation0]]
  $region30: #{tpu_custom_call.1} parent=0
    _
  %s6 = ssub.s32 1, %s4
  %s7 = scalar_select 0, %s6, %s4
  $region1: #{tpu_custom_call.1} parent=0
    #allocation2 [shape = 'u8[4096]{0}', space=vmem, size = 0x1000, scoped, tag = 'output window, operand 0, single buffered']
    #allocation3 [shape = 's32[1]{0}', space=sflag, size = 0x4, scoped, tag = 'scoped memory for tpu_custom_call.1']
    %8 = vsyncpa [#allocation3], 0
    // Predicated region
    $region2: #{tpu_custom_call.1} parent=1 // pred_check
      _
    $region3: #{tpu_custom_call.1} parent=1 // pred_check_branch
      %10 = sbr.rel (0) target = $region5
    $region4: #{tpu_custom_call.1} parent=1 // pred_region
      _
    $region5: #{tpu_custom_call.1} parent=1 // pred_fallthru
      _
    // Predicated region
    $region6: #{tpu_custom_call.1} parent=1 // pred_check
      _
    $region7: #{tpu_custom_call.1} parent=1 // pred_check_branch
      %12 = sbr.rel (0) target = $region9
    $region8: #{tpu_custom_call.1} parent=1 // pred_region
      _
    $region9: #{tpu_custom_call.1} parent=1 // pred_fallthru
      _
    // Predicated region
    $region10: #{tpu_custom_call.1} parent=1 // pred_check
      _
    $region11: #{tpu_custom_call.1} parent=1 // pred_check_branch
      %14 = sbr.rel (0) target = $region13
    $region12: #{tpu_custom_call.1} parent=1 // pred_region
      _
    $region13: #{tpu_custom_call.1} parent=1 // pred_fallthru
      _
    %v15 = vld [vmem:[%s0] sm:$0x1f]
    %v16 = vld [vmem:[%s1] sm:$0x1]
    %v17 = vld [vmem:[%s2] sm:$0x1f]
    %v18 = vlaneseq
    %v19 = vshrl.u32 %v18, 7
    %v20 = vlaneseq
    %v21 = vshrl.u32 %v20, 7
    %v22 = vsub.s32 0, %v21
    %v23 = vrot.slane %v16, %v22
    %vm24 = vcmp.eq.s32.totalorder %v19, %v23
    %vm25 = vcmask 1044480
    %v26 = vsel %vm25, %v15, -inf
    %v27 = vrot.slane %v26, 4
    %v28 = vmax.f32 %v26, %v27
    %v29 = vrot.slane %v28, 2
    %v30 = vmax.f32 %v28, %v29
    %v31 = vrot.slane %v30, 1
    %v32 = vmax.f32 %v30, %v31
    %v33 = vsub.f32 %v15, %v32
    %v34 = vmul.f32 %v33, 1.442695
    %v35 = vpow.pop %v34
    %v36 = vsel %vm25, %v35, 0.0
    %v37 = vrot.slane %v36, 4
    %v38 = vadd.f32 %v36, %v37
    %v39 = vrot.slane %v38, 2
    %v40 = vadd.f32 %v38, %v39
    %v41 = vrot.slane %v40, 1
    %v42 = vadd.f32 %v40, %v41
    %v43 = vlog2.pop %v42
    %v44 = vmul.f32 %v43, 0.6931472
    %v45 = vsel %vm24, %v15, 0.0
    %v46 = vsel %vm25, %v45, 0.0
    %v47 = vrot.slane %v46, 4
    %v48 = vadd.f32 %v46, %v47
    %v49 = vrot.slane %v48, 2
    %v50 = vadd.f32 %v48, %v49
    %v51 = vrot.slane %v50, 1
    %v52 = vadd.f32 %v50, %v51
    %54 = vset.pattern.permute.xlu0 0
    %55 = vperm.xlu0 %54, %v17
    %v56 = vpop.permute.xlu0 %55
    %v58 = vsel %vm24, %v56, 0.0
    %v59 = vsel %vm25, %v58, 0.0
    %v60 = vrot.slane %v59, 4
    %v61 = vadd.f32 %v59, %v60
    %v62 = vrot.slane %v61, 2
    %v63 = vadd.f32 %v61, %v62
    %v64 = vrot.slane %v63, 1
    %v65 = vadd.f32 %v63, %v64
    %v66 = vsub.f32 %v52, %v32
    %v67 = vsub.f32 %v66, %v44
    %v68 = vmul.f32 %v67, 1.442695
    %v69 = vpow.pop %v68
    %v70 = vsub.f32 0.0, %v65
    %v71 = vsub.f32 1.0, %v69
    %v72 = vmul.f32 %v71, %v71
    %v73 = vmul.f32 %v70, %v72
    %v74 = vmul.f32 %v73, %v67
    %p75 = scmp.ne.s32.totalorder 0, 0
    // Predicated region
    $region14: #{tpu_custom_call.1} parent=1 // pred_check
      %p76 = pneg %p75
    $region15: #{tpu_custom_call.1} parent=1 // pred_check_branch
      %78 = sbr.rel (%p76) target = $region17
    $region16: #{tpu_custom_call.1} parent=1 // pred_region
      %vm79 = vcmask 1040384
      %v80 = vsel %vm79, %v74, 0.0
      %81 = vadd.xlane.f32.xlu0 %v80
      %v82 = vpop.xlane.xlu0 %81
      %v83 = vrot.slane %v82, 4
      %v84 = vadd.f32 %v82, %v83
      %v85 = vrot.slane %v84, 2
      %v86 = vadd.f32 %v84, %v85
      %v87 = vrot.slane %v86, 1
      %v88 = vadd.f32 %v86, %v87
      %s89 = vtos %v88
      %v90 = vstv %s89
      %91 = vst [vmem:[#allocation2] sm:$0xff] %v90
    $region17: #{tpu_custom_call.1} parent=1 // pred_fallthru
      _
    %p92 = scmp.eq.s32.totalorder 0, 0
    // Predicated region
    $region18: #{tpu_custom_call.1} parent=1 // pred_check
      %p93 = pneg %p92
    $region19: #{tpu_custom_call.1} parent=1 // pred_check_branch
      %95 = sbr.rel (%p93) target = $region21
    $region20: #{tpu_custom_call.1} parent=1 // pred_region
      %v96 = vlaneseq
      %v97 = vand.u32 %v96, 127
      %vm98 = vcmp.lt.s32.totalorder %v97, 8
      %v99 = vsel %vm98, %v74, 0.0
      %vm100 = vcmask 1040384
      %v101 = vsel %vm100, %v99, 0.0
      %102 = vadd.xlane.f32.xlu0 %v101
      %v103 = vpop.xlane.xlu0 %102
      %v104 = vrot.slane %v103, 4
      %v105 = vadd.f32 %v103, %v104
      %v106 = vrot.slane %v105, 2
      %v107 = vadd.f32 %v105, %v106
      %v108 = vrot.slane %v107, 1
      %v109 = vadd.f32 %v107, %v108
      %s110 = vtos %v109
      %v111 = vstv %s110
      %112 = vst [vmem:[#allocation2] sm:$0xff] %v111
    $region21: #{tpu_custom_call.1} parent=1 // pred_fallthru
      _
    // Predicated region
    $region22: #{tpu_custom_call.1} parent=1 // pred_check
      _
    $region23: #{tpu_custom_call.1} parent=1 // pred_check_branch
      %114 = sbr.rel (0) target = $region25
    $region24: #{tpu_custom_call.1} parent=1 // pred_region
      %s116 = ssub.s32 128, 128
      %117 = vsyncadd [#allocation3], %s116
      %s119 = sshll.u32 [#allocation2], 4
      %s120 = int_to_ptr.vmem [resolvable:$true] %s119
      %122 = dma.vmem_to_hbm [thread:$0]  %s120, 128, %s3, [#allocation3]
    $region25: #{tpu_custom_call.1} parent=1 // pred_fallthru
      _
    // Predicated region
    $region26: #{tpu_custom_call.1} parent=1 // pred_check
      _
    $region27: #{tpu_custom_call.1} parent=1 // pred_check_branch
      %124 = sbr.rel (0) target = $region29
    $region28: #{tpu_custom_call.1} parent=1 // pred_region
      %125 = dma.done [#allocation3], 128
    $region29: #{tpu_custom_call.1} parent=1 // pred_fallthru
      _
    %126 = vsyncpa [#allocation3], 1

</llo_original>
